<compile_context>
chip_gen: v7x
topology: tpu7x:2x2x1
jax: 0.10.0
libtpu: 0.0.40
codegen_flags: <defaults>
</compile_context>

<pallas_src>
import functools

import jax
import jax.numpy as jnp
from jax.experimental import pallas as pl
from jax.experimental.pallas import tpu as pltpu

BN_EPS = 1e-5


# ------------------------------ Pallas kernel ------------------------------ #

def _basic_block_kernel(x_ref, l1_ref, r1_ref, b1_ref, l2_ref, r2_ref, b2_ref,
                        *rest, hout, has_proj):
    """Whole BasicBlock on lane-dense (H, N*W*C) image matrices, in VMEM."""
    if has_proj:
        lsc_ref, rsc_ref, bsc_ref, o_ref = rest
    else:
        (o_ref,) = rest

    x = x_ref[...]                                   # (Hin, N*W*Cin) f32
    x_bf = x.astype(jnp.bfloat16)

    def conv3x3(inp_bf, l_ref, r_ref, b_ref):
        # Vertical circular taps: three 0/1 row-selection matmuls (exact in
        # bf16), concatenated along lanes.  Then a single matmul whose
        # structured RHS applies horizontal circular taps + stride + channel
        # mixing + folded BN scale.  f32 accumulation, f32 bias add.
        taps = [
            jnp.dot(l_ref[kh * hout:(kh + 1) * hout, :], inp_bf,
                    preferred_element_type=jnp.float32).astype(jnp.bfloat16)
            for kh in range(3)
        ]
        patches = jnp.concatenate(taps, axis=1)      # (hout, 3*lanes_in)
        return jnp.dot(patches, r_ref[...],
                       preferred_element_type=jnp.float32) + b_ref[...]

    # conv1 + bn1 + relu
    h1 = jnp.maximum(conv3x3(x_bf, l1_ref, r1_ref, b1_ref), 0.0)
    # conv2 + bn2
    h2 = conv3x3(h1.astype(jnp.bfloat16), l2_ref, r2_ref, b2_ref)

    # shortcut
    if has_proj:
        xs = jnp.dot(lsc_ref[...], x_bf,
                     preferred_element_type=jnp.float32).astype(jnp.bfloat16)
        sc = jnp.dot(xs, rsc_ref[...],
                     preferred_element_type=jnp.float32) + bsc_ref[...]
    else:
        sc = x                                       # identity (exact f32)

    o_ref[...] = jnp.maximum(h2 + sc, 0.0).astype(o_ref.dtype)


def fused_basic_block(xm, l1, r1, b1r, l2, r2, b2r, proj=None):
    """One pallas_call for the whole block. All operands live fully in VMEM."""
    hout = l1.shape[0] // 3
    width_out = b2r.shape[1]
    to_bf = lambda a: a.astype(jnp.bfloat16)

    args = [xm, to_bf(l1), to_bf(r1), b1r, to_bf(l2), to_bf(r2), b2r]
    has_proj = proj is not None
    if has_proj:
        lsc, rsc, bscr = proj
        args += [to_bf(lsc), to_bf(rsc), bscr]

    in_specs = [pl.BlockSpec(a.shape, lambda i: (0, 0)) for a in args]
    kernel = functools.partial(_basic_block_kernel, hout=hout,
                               has_proj=has_proj)

    return pl.pallas_call(
        kernel,
        out_shape=jax.ShapeDtypeStruct((hout, width_out), jnp.float32),
        grid_spec=pltpu.PrefetchScalarGridSpec(
            num_scalar_prefetch=0,
            grid=(1,),                               # whole problem in one step
            in_specs=in_specs,
            out_specs=pl.BlockSpec((hout, width_out), lambda i: (0, 0)),
        ),
        compiler_params=pltpu.CompilerParams(
            dimension_semantics=("arbitrary",)),
    )(*args)


# ---------------- wrapper-side structured-matrix construction -------------- #

def _row_sel_stack(h_in, h_out, stride, offsets):
    """Stack of 0/1 matrices: output row ho selects input row (ho*s+off)%h_in."""
    hi_all = jnp.arange(h_in)[None, :]
    mats = []
    for off in offsets:
        hi = (jnp.arange(h_out) * stride + off) % h_in
        mats.append((hi[:, None] == hi_all).astype(jnp.float32))
    return jnp.concatenate(mats, axis=0)             # (len(offsets)*h_out, h_in)


def _block_diag_batch(block, n):
    """kron(I_n, block): block-diagonal over the batch factor of the lane axis."""
    a, b = block.shape
    return jnp.einsum('nm,ab->namb', jnp.eye(n, dtype=block.dtype),
                      block).reshape(n * a, n * b)


def _conv3_col_matrix(w_kh, scale, w_in, w_out, stride, n):
    """Column matrix for one vertical tap of a circular 3x3 conv.

    w_kh: (Cout, Cin, 3) weight slice at vertical tap kh (last axis = kw).
    Encodes horizontal circular taps, stride subsampling, Cin->Cout mixing and
    the folded BN scale.  Shape (n*w_in*Cin, n*w_out*Cout).
    """
    c_out, c_in, _ = w_kh.shape
    wo = jnp.arange(w_out)
    wi_all = jnp.arange(w_in)[:, None]
    wm = jnp.transpose(w_kh, (2, 1, 0)) * scale[None, None, :]     # (3, Cin, Cout)
    block = jnp.zeros((w_in * c_in, w_out * c_out), jnp.float32)
    for kw in range(3):
        sel = (wi_all == ((wo * stride + kw - 1) % w_in)[None, :]
               ).astype(jnp.float32)                               # (Win, Wout)
        block = block + jnp.einsum('ab,cd->acbd', sel, wm[kw]
                                   ).reshape(w_in * c_in, w_out * c_out)
    return _block_diag_batch(block, n)


def _pointwise_col_matrix(w2d, scale, w_in, w_out, stride, n):
    """Column matrix for the strided 1x1 shortcut conv + folded BN scale."""
    c_out, c_in = w2d.shape
    sel = (jnp.arange(w_in)[:, None] ==
           (jnp.arange(w_out) * stride)[None, :]).astype(jnp.float32)
    wm = w2d.T * scale[None, :]                                    # (Cin, Cout)
    block = jnp.einsum('ab,cd->acbd', sel, wm).reshape(w_in * c_in,
                                                       w_out * c_out)
    return _block_diag_batch(block, n)


def fold_bn(gamma, beta, mean, var):
    scale = gamma / jnp.sqrt(var + BN_EPS)
    bias = beta - mean * scale
    return scale, bias


# -------------------------------- forward ---------------------------------- #

def basic_block_forward(x_nchw, params, stride):
    x = x_nchw.astype(jnp.float32)
    N, Cin, H, W = x.shape
    Cout = params['conv1_w'].shape[0]
    Ho = (H - 1) // stride + 1
    Wo = (W - 1) // stride + 1

    # Lane-dense image-matrix layout: rows = H, lanes = (N, W, C).
    xm = jnp.transpose(x, (2, 0, 3, 1)).reshape(H, N * W * Cin)

    s1, b1 = fold_bn(**params['bn1'])
    s2, b2 = fold_bn(**params['bn2'])

    l1 = _row_sel_stack(H, Ho, stride, (-1, 0, 1))
    r1 = jnp.concatenate(
        [_conv3_col_matrix(params['conv1_w'][:, :, kh, :], s1, W, Wo, stride, N)
         for kh in range(3)], axis=0)
    b1r = jnp.tile(b1, N * Wo)[None, :]

    l2 = _row_sel_stack(Ho, Ho, 1, (-1, 0, 1))
    r2 = jnp.concatenate(
        [_conv3_col_matrix(params['conv2_w'][:, :, kh, :], s2, Wo, Wo, 1, N)
         for kh in range(3)], axis=0)
    b2r = jnp.tile(b2, N * Wo)[None, :]

    proj = None
    if 'sc_w' in params:
        ssc, bsc = fold_bn(**params['bn_sc'])
        lsc = _row_sel_stack(H, Ho, stride, (0,))
        rsc = _pointwise_col_matrix(params['sc_w'][:, :, 0, 0], ssc,
                                    W, Wo, stride, N)
        proj = (lsc, rsc, jnp.tile(bsc, N * Wo)[None, :])

    out_m = fused_basic_block(xm, l1, r1, b1r, l2, r2, b2r, proj)  # (Ho, N*Wo*Cout)
    out = out_m.reshape(Ho, N, Wo, Cout)
    return jnp.transpose(out, (1, 3, 0, 2))                        # NCHW


# --------------------------- parameter generation -------------------------- #

def _bn_params(key, c):
    k1, k2, k3, k4 = jax.random.split(key, 4)
    return dict(
        gamma=1.0 + 0.1 * jax.random.normal(k1, (c,), jnp.float32),
        beta=0.1 * jax.random.normal(k2, (c,), jnp.float32),
        mean=0.1 * jax.random.normal(k3, (c,), jnp.float32),
        var=1.0 + 0.1 * jax.random.uniform(k4, (c,), jnp.float32),
    )


def init_basic_block_params(key, in_planes, planes, stride):
    ks = jax.random.split(key, 6)
    p = {
        'conv1_w': 0.1 * jax.random.normal(ks[0], (planes, in_planes, 3, 3),
                                           jnp.float32),
        'conv2_w': 0.1 * jax.random.normal(ks[1], (planes, planes, 3, 3),
                                           jnp.float32),
        'bn1': _bn_params(ks[2], planes),
        'bn2': _bn_params(ks[3], planes),
    }
    if stride != 1 or in_planes != planes:
        p['sc_w'] = 0.1 * jax.random.normal(ks[4], (planes, in_planes, 1, 1),
                                            jnp.float32)
        p['bn_sc'] = _bn_params(ks[5], planes)
    return p


# ---------------------------- pure-JAX reference --------------------------- #

def reference_forward(x_nchw, params, stride):
    x = jnp.transpose(x_nchw, (0, 2, 3, 1)).astype(jnp.float32)

    def conv_circ3x3(x, w_oihw, s):
        xp = jnp.pad(x, ((0, 0), (1, 1), (1, 1), (0, 0)), mode='wrap')
        w = jnp.transpose(w_oihw, (2, 3, 1, 0))  # HWIO
        return jax.lax.conv_general_dilated(
            xp, w, (s, s), 'VALID',
            dimension_numbers=('NHWC', 'HWIO', 'NHWC'))

    def conv1x1(x, w_oihw, s):
        w = jnp.transpose(w_oihw, (2, 3, 1, 0))
        return jax.lax.conv_general_dilated(
            x, w, (s, s), 'VALID',
            dimension_numbers=('NHWC', 'HWIO', 'NHWC'))

    def bn(x, gamma, beta, mean, var):
        return (x - mean) / jnp.sqrt(var + BN_EPS) * gamma + beta

    out = jax.nn.relu(bn(conv_circ3x3(x, params['conv1_w'], stride),
                         **params['bn1']))
    out = bn(conv_circ3x3(out, params['conv2_w'], 1), **params['bn2'])
    if 'sc_w' in params:
        sc = bn(conv1x1(x, params['sc_w'], stride), **params['bn_sc'])
    else:
        sc = x
    out = jax.nn.relu(out + sc)
    return jnp.transpose(out, (0, 3, 1, 2))


# ---------------------------------- main ----------------------------------- #

if __name__ == "__main__":
    key = jax.random.PRNGKey(0)
    kx, kp1, kp2 = jax.random.split(key, 3)

    # Input (PyTorch NCHW): batch=2, in_planes=4, 16x16 spatial.
    x = jax.random.normal(kx, (2, 4, 16, 16), jnp.float32)

    fwd = jax.jit(basic_block_forward, static_argnums=2)
    ref = jax.jit(reference_forward, static_argnums=2)

    # Tolerance accounts for bf16 MXU operands vs f32 reference.
    TOL = dict(atol=3e-2, rtol=3e-2)

    # Case 1: projection block (stride=2, 4 -> 8 planes; conv shortcut path).
    p1 = init_basic_block_params(kp1, in_planes=4, planes=8, stride=2)
    y1 = jax.block_until_ready(fwd(x, p1, 2))
    r1 = jax.block_until_ready(ref(x, p1, 2))
    assert y1.shape == (2, 8, 8, 8), y1.shape
    assert jnp.allclose(y1, r1, **TOL), float(jnp.max(jnp.abs(y1 - r1)))

    # Case 2: identity block (stride=1, 4 -> 4 planes; identity shortcut).
    p2 = init_basic_block_params(kp2, in_planes=4, planes=4, stride=1)
    y2 = jax.block_until_ready(fwd(x, p2, 1))
    r2 = jax.block_until_ready(ref(x, p2, 1))
    assert y2.shape == (2, 4, 16, 16), y2.shape
    assert jnp.allclose(y2, r2, **TOL), float(jnp.max(jnp.abs(y2 - r2)))

    print("KERNEL_OK")
</pallas_src>

<mosaic_0001>
module attributes {stable_mosaic.version = 11 : i64} {
  func.func @_basic_block_kernel(%arg0: i32, %arg1: memref<16x128xf32, #tpu.memory_space<vmem>>, %arg2: memref<24x16xbf16, #tpu.memory_space<vmem>>, %arg3: memref<384x128xbf16, #tpu.memory_space<vmem>>, %arg4: memref<1x128xf32, #tpu.memory_space<vmem>>, %arg5: memref<24x8xbf16, #tpu.memory_space<vmem>>, %arg6: memref<384x128xbf16, #tpu.memory_space<vmem>>, %arg7: memref<1x128xf32, #tpu.memory_space<vmem>>, %arg8: memref<8x16xbf16, #tpu.memory_space<vmem>>, %arg9: memref<128x128xbf16, #tpu.memory_space<vmem>>, %arg10: memref<1x128xf32, #tpu.memory_space<vmem>>, %arg11: memref<8x128xf32, #tpu.memory_space<vmem>>) attributes {dimension_semantics = [#tpu.dimension_semantics<arbitrary>], iteration_bounds = array<i64: 1>, scalar_prefetch = 0 : i64, scratch_operands = 0 : i64, tpu.core_type = #tpu.core_type<tc>, window_params = [{pipeline_mode = #tpu.pipeline_mode<synchronous>, transform_indices = @transform_0, window_bounds = array<i64: 16, 128>}, {pipeline_mode = #tpu.pipeline_mode<synchronous>, transform_indices = @transform_1, window_bounds = array<i64: 24, 16>}, {pipeline_mode = #tpu.pipeline_mode<synchronous>, transform_indices = @transform_2, window_bounds = array<i64: 384, 128>}, {pipeline_mode = #tpu.pipeline_mode<synchronous>, transform_indices = @transform_3, window_bounds = array<i64: 1, 128>}, {pipeline_mode = #tpu.pipeline_mode<synchronous>, transform_indices = @transform_4, window_bounds = array<i64: 24, 8>}, {pipeline_mode = #tpu.pipeline_mode<synchronous>, transform_indices = @transform_5, window_bounds = array<i64: 384, 128>}, {pipeline_mode = #tpu.pipeline_mode<synchronous>, transform_indices = @transform_6, window_bounds = array<i64: 1, 128>}, {pipeline_mode = #tpu.pipeline_mode<synchronous>, transform_indices = @transform_7, window_bounds = array<i64: 8, 16>}, {pipeline_mode = #tpu.pipeline_mode<synchronous>, transform_indices = @transform_8, window_bounds = array<i64: 128, 128>}, {pipeline_mode = #tpu.pipeline_mode<synchronous>, transform_indices = @transform_9, window_bounds = array<i64: 1, 128>}, {pipeline_mode = #tpu.pipeline_mode<synchronous>, transform_indices = @transform_10, window_bounds = array<i64: 8, 128>}]} {
    %c0 = arith.constant 0 : index
    %c0_0 = arith.constant 0 : index
    %0 = vector.load %arg1[%c0, %c0_0] : memref<16x128xf32, #tpu.memory_space<vmem>>, vector<16x128xf32>
    %1 = arith.truncf %0 : vector<16x128xf32> to vector<16x128xbf16>
    %c0_1 = arith.constant 0 : index
    %c0_2 = arith.constant 0 : index
    %2 = vector.load %arg2[%c0_1, %c0_2] : memref<24x16xbf16, #tpu.memory_space<vmem>>, vector<8x16xbf16>
    %cst = arith.constant dense<0.000000e+00> : vector<8x128xf32>
    %3 = tpu.matmul %2, %1, %cst {dimension_numbers = #tpu.dot_dimension_numbers<[1], [0], [0], [1], [0, 0, 1, 1], [], []>} : vector<8x16xbf16>, vector<16x128xbf16>, vector<8x128xf32> -> vector<8x128xf32>
    %4 = arith.truncf %3 : vector<8x128xf32> to vector<8x128xbf16>
    %c8 = arith.constant 8 : index
    %c0_3 = arith.constant 0 : index
    %5 = vector.load %arg2[%c8, %c0_3] : memref<24x16xbf16, #tpu.memory_space<vmem>>, vector<8x16xbf16>
    %cst_4 = arith.constant dense<0.000000e+00> : vector<8x128xf32>
    %6 = tpu.matmul %5, %1, %cst_4 {dimension_numbers = #tpu.dot_dimension_numbers<[1], [0], [0], [1], [0, 0, 1, 1], [], []>} : vector<8x16xbf16>, vector<16x128xbf16>, vector<8x128xf32> -> vector<8x128xf32>
    %7 = arith.truncf %6 : vector<8x128xf32> to vector<8x128xbf16>
    %c16 = arith.constant 16 : index
    %c0_5 = arith.constant 0 : index
    %8 = vector.load %arg2[%c16, %c0_5] : memref<24x16xbf16, #tpu.memory_space<vmem>>, vector<8x16xbf16>
    %cst_6 = arith.constant dense<0.000000e+00> : vector<8x128xf32>
    %9 = tpu.matmul %8, %1, %cst_6 {dimension_numbers = #tpu.dot_dimension_numbers<[1], [0], [0], [1], [0, 0, 1, 1], [], []>} : vector<8x16xbf16>, vector<16x128xbf16>, vector<8x128xf32> -> vector<8x128xf32>
    %10 = arith.truncf %9 : vector<8x128xf32> to vector<8x128xbf16>
    %11 = tpu.concatenate %4, %7, %10 in 1 : vector<8x128xbf16>, vector<8x128xbf16>, vector<8x128xbf16> -> vector<8x384xbf16>
    %c0_7 = arith.constant 0 : index
    %c0_8 = arith.constant 0 : index
    %12 = vector.load %arg3[%c0_7, %c0_8] : memref<384x128xbf16, #tpu.memory_space<vmem>>, vector<384x128xbf16>
    %cst_9 = arith.constant dense<0.000000e+00> : vector<8x128xf32>
    %13 = tpu.matmul %11, %12, %cst_9 {dimension_numbers = #tpu.dot_dimension_numbers<[1], [0], [0], [1], [0, 0, 1, 1], [], []>} : vector<8x384xbf16>, vector<384x128xbf16>, vector<8x128xf32> -> vector<8x128xf32>
    %c0_10 = arith.constant 0 : index
    %c0_11 = arith.constant 0 : index
    %14 = vector.load %arg4[%c0_10, %c0_11] : memref<1x128xf32, #tpu.memory_space<vmem>>, vector<1x128xf32>
    %15 = vector.broadcast %14 : vector<1x128xf32> to vector<8x128xf32>
    %16 = arith.addf %13, %15 : vector<8x128xf32>
    %cst_12 = arith.constant 0.000000e+00 : f32
    %17 = vector.broadcast %cst_12 : f32 to vector<8x128xf32>
    %18 = arith.maximumf %16, %17 : vector<8x128xf32>
    %19 = arith.truncf %18 : vector<8x128xf32> to vector<8x128xbf16>
    %c0_13 = arith.constant 0 : index
    %c0_14 = arith.constant 0 : index
    %20 = vector.load %arg5[%c0_13, %c0_14] : memref<24x8xbf16, #tpu.memory_space<vmem>>, vector<8x8xbf16>
    %cst_15 = arith.constant dense<0.000000e+00> : vector<8x128xf32>
    %21 = tpu.matmul %20, %19, %cst_15 {dimension_numbers = #tpu.dot_dimension_numbers<[1], [0], [0], [1], [0, 0, 1, 1], [], []>} : vector<8x8xbf16>, vector<8x128xbf16>, vector<8x128xf32> -> vector<8x128xf32>
    %22 = arith.truncf %21 : vector<8x128xf32> to vector<8x128xbf16>
    %c8_16 = arith.constant 8 : index
    %c0_17 = arith.constant 0 : index
    %23 = vector.load %arg5[%c8_16, %c0_17] : memref<24x8xbf16, #tpu.memory_space<vmem>>, vector<8x8xbf16>
    %cst_18 = arith.constant dense<0.000000e+00> : vector<8x128xf32>
    %24 = tpu.matmul %23, %19, %cst_18 {dimension_numbers = #tpu.dot_dimension_numbers<[1], [0], [0], [1], [0, 0, 1, 1], [], []>} : vector<8x8xbf16>, vector<8x128xbf16>, vector<8x128xf32> -> vector<8x128xf32>
    %25 = arith.truncf %24 : vector<8x128xf32> to vector<8x128xbf16>
    %c16_19 = arith.constant 16 : index
    %c0_20 = arith.constant 0 : index
    %26 = vector.load %arg5[%c16_19, %c0_20] : memref<24x8xbf16, #tpu.memory_space<vmem>>, vector<8x8xbf16>
    %cst_21 = arith.constant dense<0.000000e+00> : vector<8x128xf32>
    %27 = tpu.matmul %26, %19, %cst_21 {dimension_numbers = #tpu.dot_dimension_numbers<[1], [0], [0], [1], [0, 0, 1, 1], [], []>} : vector<8x8xbf16>, vector<8x128xbf16>, vector<8x128xf32> -> vector<8x128xf32>
    %28 = arith.truncf %27 : vector<8x128xf32> to vector<8x128xbf16>
    %29 = tpu.concatenate %22, %25, %28 in 1 : vector<8x128xbf16>, vector<8x128xbf16>, vector<8x128xbf16> -> vector<8x384xbf16>
    %c0_22 = arith.constant 0 : index
    %c0_23 = arith.constant 0 : index
    %30 = vector.load %arg6[%c0_22, %c0_23] : memref<384x128xbf16, #tpu.memory_space<vmem>>, vector<384x128xbf16>
    %cst_24 = arith.constant dense<0.000000e+00> : vector<8x128xf32>
    %31 = tpu.matmul %29, %30, %cst_24 {dimension_numbers = #tpu.dot_dimension_numbers<[1], [0], [0], [1], [0, 0, 1, 1], [], []>} : vector<8x384xbf16>, vector<384x128xbf16>, vector<8x128xf32> -> vector<8x128xf32>
    %c0_25 = arith.constant 0 : index
    %c0_26 = arith.constant 0 : index
    %32 = vector.load %arg7[%c0_25, %c0_26] : memref<1x128xf32, #tpu.memory_space<vmem>>, vector<1x128xf32>
    %33 = vector.broadcast %32 : vector<1x128xf32> to vector<8x128xf32>
    %34 = arith.addf %31, %33 : vector<8x128xf32>
    %c0_27 = arith.constant 0 : index
    %c0_28 = arith.constant 0 : index
    %35 = vector.load %arg8[%c0_27, %c0_28] : memref<8x16xbf16, #tpu.memory_space<vmem>>, vector<8x16xbf16>
    %cst_29 = arith.constant dense<0.000000e+00> : vector<8x128xf32>
    %36 = tpu.matmul %35, %1, %cst_29 {dimension_numbers = #tpu.dot_dimension_numbers<[1], [0], [0], [1], [0, 0, 1, 1], [], []>} : vector<8x16xbf16>, vector<16x128xbf16>, vector<8x128xf32> -> vector<8x128xf32>
    %37 = arith.truncf %36 : vector<8x128xf32> to vector<8x128xbf16>
    %c0_30 = arith.constant 0 : index
    %c0_31 = arith.constant 0 : index
    %38 = vector.load %arg9[%c0_30, %c0_31] : memref<128x128xbf16, #tpu.memory_space<vmem>>, vector<128x128xbf16>
    %cst_32 = arith.constant dense<0.000000e+00> : vector<8x128xf32>
    %39 = tpu.matmul %37, %38, %cst_32 {dimension_numbers = #tpu.dot_dimension_numbers<[1], [0], [0], [1], [0, 0, 1, 1], [], []>} : vector<8x128xbf16>, vector<128x128xbf16>, vector<8x128xf32> -> vector<8x128xf32>
    %c0_33 = arith.constant 0 : index
    %c0_34 = arith.constant 0 : index
    %40 = vector.load %arg10[%c0_33, %c0_34] : memref<1x128xf32, #tpu.memory_space<vmem>>, vector<1x128xf32>
    %41 = vector.broadcast %40 : vector<1x128xf32> to vector<8x128xf32>
    %42 = arith.addf %39, %41 : vector<8x128xf32>
    %43 = arith.addf %34, %42 : vector<8x128xf32>
    %cst_35 = arith.constant 0.000000e+00 : f32
    %44 = vector.broadcast %cst_35 : f32 to vector<8x128xf32>
    %45 = arith.maximumf %43, %44 : vector<8x128xf32>
    %c0_36 = arith.constant 0 : index
    %c0_37 = arith.constant 0 : index
    %46 = vector.load %arg11[%c0_36, %c0_37] : memref<8x128xf32, #tpu.memory_space<vmem>>, vector<8x128xf32>
    tpu.vector_store %arg11[%c0_36, %c0_37], %45 {strides = array<i32>} : memref<8x128xf32, #tpu.memory_space<vmem>>, vector<8x128xf32>,
    return
  }
  func.func @transform_0(%arg0: i32) -> (i32, i32) {
    %c0_i32 = arith.constant 0 : i32
    %c0_i32_0 = arith.constant 0 : i32
    %c0_i32_1 = arith.constant 0 : i32
    return %c0_i32, %c0_i32_0 : i32, i32
  }
  func.func @transform_1(%arg0: i32) -> (i32, i32) {
    %c0_i32 = arith.constant 0 : i32
    %c0_i32_0 = arith.constant 0 : i32
    %c0_i32_1 = arith.constant 0 : i32
    return %c0_i32, %c0_i32_0 : i32, i32
  }
  func.func @transform_2(%arg0: i32) -> (i32, i32) {
    %c0_i32 = arith.constant 0 : i32
    %c0_i32_0 = arith.constant 0 : i32
    %c0_i32_1 = arith.constant 0 : i32
    return %c0_i32, %c0_i32_0 : i32, i32
  }
  func.func @transform_3(%arg0: i32) -> (i32, i32) {
    %c0_i32 = arith.constant 0 : i32
    %c0_i32_0 = arith.constant 0 : i32
    %c0_i32_1 = arith.constant 0 : i32
    return %c0_i32, %c0_i32_0 : i32, i32
  }
  func.func @transform_4(%arg0: i32) -> (i32, i32) {
    %c0_i32 = arith.constant 0 : i32
    %c0_i32_0 = arith.constant 0 : i32
    %c0_i32_1 = arith.constant 0 : i32
    return %c0_i32, %c0_i32_0 : i32, i32
  }
  func.func @transform_5(%arg0: i32) -> (i32, i32) {
    %c0_i32 = arith.constant 0 : i32
    %c0_i32_0 = arith.constant 0 : i32
    %c0_i32_1 = arith.constant 0 : i32
    return %c0_i32, %c0_i32_0 : i32, i32
  }
  func.func @transform_6(%arg0: i32) -> (i32, i32) {
    %c0_i32 = arith.constant 0 : i32
    %c0_i32_0 = arith.constant 0 : i32
    %c0_i32_1 = arith.constant 0 : i32
    return %c0_i32, %c0_i32_0 : i32, i32
  }
  func.func @transform_7(%arg0: i32) -> (i32, i32) {
    %c0_i32 = arith.constant 0 : i32
    %c0_i32_0 = arith.constant 0 : i32
    %c0_i32_1 = arith.constant 0 : i32
    return %c0_i32, %c0_i32_0 : i32, i32
  }
  func.func @transform_8(%arg0: i32) -> (i32, i32) {
    %c0_i32 = arith.constant 0 : i32
    %c0_i32_0 = arith.constant 0 : i32
    %c0_i32_1 = arith.constant 0 : i32
    return %c0_i32, %c0_i32_0 : i32, i32
  }
  func.func @transform_9(%arg0: i32) -> (i32, i32) {
    %c0_i32 = arith.constant 0 : i32
    %c0_i32_0 = arith.constant 0 : i32
    %c0_i32_1 = arith.constant 0 : i32
    return %c0_i32, %c0_i32_0 : i32, i32
  }
  func.func @transform_10(%arg0: i32) -> (i32, i32) {
    %c0_i32 = arith.constant 0 : i32
    %c0_i32_0 = arith.constant 0 : i32
    %c0_i32_1 = arith.constant 0 : i32
    return %c0_i32, %c0_i32_0 : i32, i32
  }
}

</mosaic_0001>

<llo_original>
// kernel: tile.18
$region0: #{tile.18}
  #allocation0 [shape = 's32[1]{0}', space=sflag, size = 0x4, scoped, tag = 'scoped memory for tile.18']
  %s0 = inlined_call_operand.vmem [shape: f32[8], index: 0, kind: input, shape index: {}]
  %s1 = inlined_call_operand.vmem [shape: f32[16,8], index: 1, kind: output, shape index: {}]
  // Predicated region
  $region2: #{tile.18} parent=0 // pred_check
    _
  $region3: #{tile.18} parent=0 // pred_check_branch
    %3 = sbr.rel (0) target = $region5
  $region4: #{tile.18} parent=0 // pred_region
    _
  $region5: #{tile.18} parent=0 // pred_fallthru
    _
  %v4 = vld [vmem:[%s0] ss:$0 sm:$0xff]
  %5 = vst [vmem:[%s1] sm:$0xff] %v4
  %s6 = scalar_lea.vmem %s1, 8
  %7 = vst [vmem:[%s6] sm:$0xff] %v4

// kernel: tile.19
$region0: #{tile.19}
  %s0 = inlined_call_operand.vmem [shape: f32[16,8], index: 0, kind: input, shape index: {}]
  %s1 = inlined_call_operand.vmem [shape: f32[1,128], index: 1, kind: output, shape index: {}]
  $region1: #{tile.19} parent=0
    #allocation0 [shape = 'u8[4096]{0}', space=vmem, size = 0x1000, scoped, tag = 'scoped mem for output reshape']
    %v2 = vld [vmem:[%s0] sm:$0x1]
    %vm3 = vcmask 64512
    %4 = vst.msk [vmem:[#allocation0] sm:$0x1] %vm3, %v2
    %s5 = scalar_lea.vmem %s0, 15
    %v6 = vld [vmem:[%s5] sm:$0x1]
    %7 = vrot.lane.b32.xlu0 %v6, 120
    %v8 = vpop.permute.xlu0 %7
    %vm9 = vcmask 1048512
    %10 = vst.msk [vmem:[#allocation0] sm:$0x1] %vm9, %v8
    %s11 = scalar_lea.vmem %s0, 14
    %v12 = vld [vmem:[%s11] sm:$0x1]
    %13 = vrot.lane.b32.xlu0 %v12, 112
    %v14 = vpop.permute.xlu0 %13
    %vm15 = vcmask 982912
    %16 = vst.msk [vmem:[#allocation0] sm:$0x1] %vm15, %v14
    %s17 = scalar_lea.vmem %s0, 13
    %v18 = vld [vmem:[%s17] sm:$0x1]
    %19 = vrot.lane.b32.xlu0 %v18, 104
    %v20 = vpop.permute.xlu0 %19
    %vm21 = vcmask 917312
    %22 = vst.msk [vmem:[#allocation0] sm:$0x1] %vm21, %v20
    %s23 = scalar_lea.vmem %s0, 12
    %v24 = vld [vmem:[%s23] sm:$0x1]
    %25 = vrot.lane.b32.xlu0 %v24, 96
    %v26 = vpop.permute.xlu0 %25
    %vm27 = vcmask 851712
    %28 = vst.msk [vmem:[#allocation0] sm:$0x1] %vm27, %v26
    %s29 = scalar_lea.vmem %s0, 11
    %v30 = vld [vmem:[%s29] sm:$0x1]
    %31 = vrot.lane.b32.xlu0 %v30, 88
    %v32 = vpop.permute.xlu0 %31
    %vm33 = vcmask 786112
    %34 = vst.msk [vmem:[#allocation0] sm:$0x1] %vm33, %v32
    %s35 = scalar_lea.vmem %s0, 10
    %v36 = vld [vmem:[%s35] sm:$0x1]
    %37 = vrot.lane.b32.xlu0 %v36, 80
    %v38 = vpop.permute.xlu0 %37
    %vm39 = vcmask 720512
    %40 = vst.msk [vmem:[#allocation0] sm:$0x1] %vm39, %v38
    %s41 = scalar_lea.vmem %s0, 9
    %v42 = vld [vmem:[%s41] sm:$0x1]
    %43 = vrot.lane.b32.xlu0 %v42, 72
    %v44 = vpop.permute.xlu0 %43
    %vm45 = vcmask 654912
    %46 = vst.msk [vmem:[#allocation0] sm:$0x1] %vm45, %v44
    %s47 = scalar_lea.vmem %s0, 8
    %v48 = vld [vmem:[%s47] sm:$0x1]
    %49 = vrot.lane.b32.xlu0 %v48, 64
    %v50 = vpop.permute.xlu0 %49
    %vm51 = vcmask 589312
    %52 = vst.msk [vmem:[#allocation0] sm:$0x1] %vm51, %v50
    %s53 = scalar_lea.vmem %s0, 7
    %v54 = vld [vmem:[%s53] sm:$0x1]
    %55 = vrot.lane.b32.xlu0 %v54, 56
    %v56 = vpop.permute.xlu0 %55
    %vm57 = vcmask 523712
    %58 = vst.msk [vmem:[#allocation0] sm:$0x1] %vm57, %v56
    %s59 = scalar_lea.vmem %s0, 6
    %v60 = vld [vmem:[%s59] sm:$0x1]
    %61 = vrot.lane.b32.xlu0 %v60, 48
    %v62 = vpop.permute.xlu0 %61
    %vm63 = vcmask 458112
    %64 = vst.msk [vmem:[#allocation0] sm:$0x1] %vm63, %v62
    %s65 = scalar_lea.vmem %s0, 5
    %v66 = vld [vmem:[%s65] sm:$0x1]
    %67 = vrot.lane.b32.xlu0 %v66, 40
    %v68 = vpop.permute.xlu0 %67
    %vm69 = vcmask 392512
    %70 = vst.msk [vmem:[#allocation0] sm:$0x1] %vm69, %v68
    %s71 = scalar_lea.vmem %s0, 4
    %v72 = vld [vmem:[%s71] sm:$0x1]
    %73 = vrot.lane.b32.xlu0 %v72, 32
    %v74 = vpop.permute.xlu0 %73
    %vm75 = vcmask 326912
    %76 = vst.msk [vmem:[#allocation0] sm:$0x1] %vm75, %v74
    %s77 = scalar_lea.vmem %s0, 3
    %v78 = vld [vmem:[%s77] sm:$0x1]
    %79 = vrot.lane.b32.xlu0 %v78, 24
    %v80 = vpop.permute.xlu0 %79
    %vm81 = vcmask 261312
    %82 = vst.msk [vmem:[#allocation0] sm:$0x1] %vm81, %v80
    %s83 = scalar_lea.vmem %s0, 2
    %v84 = vld [vmem:[%s83] sm:$0x1]
    %85 = vrot.lane.b32.xlu0 %v84, 16
    %v86 = vpop.permute.xlu0 %85
    %vm87 = vcmask 195712
    %88 = vst.msk [vmem:[#allocation0] sm:$0x1] %vm87, %v86
    %s89 = scalar_lea.vmem %s0, 1
    %v90 = vld [vmem:[%s89] sm:$0x1]
    %91 = vrot.lane.b32.xlu0 %v90, 8
    %v92 = vpop.permute.xlu0 %91
    %vm93 = vcmask 130112
    %94 = vst.msk [vmem:[#allocation0] sm:$0x1] %vm93, %v92
    %s96 = sshllo.u32 0, 1
    %v98 = vld [vmem:[#allocation0] sm:%s96]
    %s99 = sshllo.u32 0, 1
    %100 = vst [vmem:[%s1] sm:%s99] %v98

// kernel: basic_block_forward.1
$region0: #{basic_block_forward.1}
  #allocation0 [shape = 'u32[]', space=smem, size = 0x4, offset = 0x4, fixed_abs, tag = 'smem constant byte address 0x4 - core index']
  #allocation1 [shape = 'u32[144,128]{1,0:T(1,128)}', space=vmem, size = 0x12000, scoped, tag = 'internal scratch']
  %s0 = inlined_call_operand.vmem [shape: f32[16,128], index: 0, kind: input, shape index: {}]
  %s1 = inlined_call_operand.vmem [shape: bf16[24,16], index: 1, kind: input, shape index: {}]
  %s2 = inlined_call_operand.vmem [shape: bf16[384,128], index: 2, kind: input, shape index: {}]
  %s3 = inlined_call_operand.vmem [shape: f32[1,128], index: 3, kind: input, shape index: {}]
  %s4 = inlined_call_operand.vmem [shape: bf16[24,8], index: 4, kind: input, shape index: {}]
  %s5 = inlined_call_operand.vmem [shape: bf16[384,128], index: 5, kind: input, shape index: {}]
  %s6 = inlined_call_operand.vmem [shape: f32[1,128], index: 6, kind: input, shape index: {}]
  %s7 = inlined_call_operand.vmem [shape: bf16[8,16], index: 7, kind: input, shape index: {}]
  %s8 = inlined_call_operand.vmem [shape: bf16[128,128], index: 8, kind: input, shape index: {}]
  %s9 = inlined_call_operand.vmem [shape: f32[1,128], index: 9, kind: input, shape index: {}]
  %s10 = inlined_call_operand.vmem [shape: f32[8,128], index: 10, kind: output, shape index: {}]
  %s11 = sld [smem:[#allocation0]]
  $region50: #{basic_block_forward.1} parent=0
    _
  %s13 = ssub.s32 1, %s11
  %s14 = scalar_select 0, %s13, %s11
  // Predicated region
  $region2: #{basic_block_forward.1} parent=0 // pred_check
    _
  $region3: #{basic_block_forward.1} parent=0 // pred_check_branch
    %16 = sbr.rel (0) target = $region5
  $region4: #{basic_block_forward.1} parent=0 // pred_region
    _
  $region5: #{basic_block_forward.1} parent=0 // pred_fallthru
    _
  // Predicated region
  $region6: #{basic_block_forward.1} parent=0 // pred_check
    _
  $region7: #{basic_block_forward.1} parent=0 // pred_check_branch
    %18 = sbr.rel (0) target = $region9
  $region8: #{basic_block_forward.1} parent=0 // pred_region
    _
  $region9: #{basic_block_forward.1} parent=0 // pred_fallthru
    _
  // Predicated region
  $region10: #{basic_block_forward.1} parent=0 // pred_check
    _
  $region11: #{basic_block_forward.1} parent=0 // pred_check_branch
    %20 = sbr.rel (0) target = $region13
  $region12: #{basic_block_forward.1} parent=0 // pred_region
    _
  $region13: #{basic_block_forward.1} parent=0 // pred_fallthru
    _
  // Predicated region
  $region14: #{basic_block_forward.1} parent=0 // pred_check
    _
  $region15: #{basic_block_forward.1} parent=0 // pred_check_branch
    %22 = sbr.rel (0) target = $region17
  $region16: #{basic_block_forward.1} parent=0 // pred_region
    _
  $region17: #{basic_block_forward.1} parent=0 // pred_fallthru
    _
  // Predicated region
  $region18: #{basic_block_forward.1} parent=0 // pred_check
    _
  $region19: #{basic_block_forward.1} parent=0 // pred_check_branch
    %24 = sbr.rel (0) target = $region21
  $region20: #{basic_block_forward.1} parent=0 // pred_region
    _
  $region21: #{basic_block_forward.1} parent=0 // pred_fallthru
    _
  // Predicated region
  $region22: #{basic_block_forward.1} parent=0 // pred_check
    _
  $region23: #{basic_block_forward.1} parent=0 // pred_check_branch
    %26 = sbr.rel (0) target = $region25
  $region24: #{basic_block_forward.1} parent=0 // pred_region
    _
  $region25: #{basic_block_forward.1} parent=0 // pred_fallthru
    _
  // Predicated region
  $region26: #{basic_block_forward.1} parent=0 // pred_check
    _
  $region27: #{basic_block_forward.1} parent=0 // pred_check_branch
    %28 = sbr.rel (0) target = $region29
  $region28: #{basic_block_forward.1} parent=0 // pred_region
    _
  $region29: #{basic_block_forward.1} parent=0 // pred_fallthru
    _
  // Predicated region
  $region30: #{basic_block_forward.1} parent=0 // pred_check
    _
  $region31: #{basic_block_forward.1} parent=0 // pred_check_branch
    %30 = sbr.rel (0) target = $region33
  $region32: #{basic_block_forward.1} parent=0 // pred_region
    _
  $region33: #{basic_block_forward.1} parent=0 // pred_fallthru
    _
  // Predicated region
  $region34: #{basic_block_forward.1} parent=0 // pred_check
    _
  $region35: #{basic_block_forward.1} parent=0 // pred_check_branch
    %32 = sbr.rel (0) target = $region37
  $region36: #{basic_block_forward.1} parent=0 // pred_region
    _
  $region37: #{basic_block_forward.1} parent=0 // pred_fallthru
    _
  // Predicated region
  $region38: #{basic_block_forward.1} parent=0 // pred_check
    _
  $region39: #{basic_block_forward.1} parent=0 // pred_check_branch
    %34 = sbr.rel (0) target = $region41
  $region40: #{basic_block_forward.1} parent=0 // pred_region
    _
  $region41: #{basic_block_forward.1} parent=0 // pred_fallthru
    _
  %v36 = vld [vmem:[%s0] sm:$0xff]
  %v37 = vld [vmem:[%s0 + $0x8] sm:$0xff]
  %v38 = vpack.c.bf16 %v37, %v36
  %v39 = vld [vmem:[%s1] sm:$0xf]
  %vm40 = vcmask 130048
  %v42 = vsel %vm40, %v39, 0
  %44 = vmatprep.subr.bf16.mxu0 0
  %45 = vmatpush1.bf16.msra.mxu0 %v38
  %46 = vmatprep.subr.bf16.mxu0 0
  %47 = vmatpush1.bf16.msra.mxu0 0
  %48 = vmatprep.subr.bf16.mxu0 0
  %49 = vmatpush1.bf16.msra.mxu0 0
  %50 = vmatprep.subr.bf16.mxu0 0
  %51 = vmatpush1.bf16.msra.mxu0 0
  %52 = vmatprep.subr.bf16.mxu0 0
  %53 = vmatpush1.bf16.msra.mxu0 0
  %54 = vmatprep.subr.bf16.mxu0 0
  %55 = vmatpush1.bf16.msra.mxu0 0
  %56 = vmatprep.subr.bf16.mxu0 0
  %57 = vmatpush1.bf16.msra.mxu0 0
  %58 = vmatprep.subr.bf16.mxu0 0
  %59 = vmatpush1.bf16.msra.mxu0 0
  %60 = vmatprep.subr.bf16.mxu0 0
  %61 = vmatpush1.bf16.msra.mxu0 0
  %62 = vmatprep.subr.bf16.mxu0 0
  %63 = vmatpush1.bf16.msra.mxu0 0
  %64 = vmatprep.subr.bf16.mxu0 0
  %65 = vmatpush1.bf16.msra.mxu0 0
  %66 = vmatprep.subr.bf16.mxu0 0
  %67 = vmatpush1.bf16.msra.mxu0 0
  %68 = vmatprep.subr.bf16.mxu0 0
  %69 = vmatpush1.bf16.msra.mxu0 0
  %70 = vmatprep.subr.bf16.mxu0 0
  %71 = vmatpush1.bf16.msra.mxu0 0
  %72 = vmatprep.subr.bf16.mxu0 0
  %73 = vmatpush1.bf16.msra.mxu0 0
  %74 = vmatprep.subr.bf16.mxu0 0
  %75 = vmatpush1.bf16.msra.mxu0 0
  %76 = vmatprep.mubr.bf16.mxu0 0
  %77 = vmatmul.mubr.bf16.gmra.mrb[0].mxu0 %v42
  %v78 = vpop.f32.mrb[0].mxu0
  %v79 = vadd.f32 0.0, %v78
  %v80 = vpop.f32.mrb[0].mxu0
  %v81 = vpop.f32.mrb[0].mxu0
  %v82 = vpop.f32.mrb[0].mxu0
  %83 = vdwg.mxu0
  %v84 = vpack.c.bf16 %v79, %v79
  %v85 = vld [vmem:[%s1 + $0x4] sm:$0xf]
  %v87 = vsel %vm40, %v85, 0
  %89 = vmatprep.subr.bf16.mxu0 0
  %90 = vmatpush1.bf16.msra.mxu0 %v38
  %91 = vmatprep.subr.bf16.mxu0 0
  %92 = vmatpush1.bf16.msra.mxu0 0
  %93 = vmatprep.subr.bf16.mxu0 0
  %94 = vmatpush1.bf16.msra.mxu0 0
  %95 = vmatprep.subr.bf16.mxu0 0
  %96 = vmatpush1.bf16.msra.mxu0 0
  %97 = vmatprep.subr.bf16.mxu0 0
  %98 = vmatpush1.bf16.msra.mxu0 0
  %99 = vmatprep.subr.bf16.mxu0 0
  %100 = vmatpush1.bf16.msra.mxu0 0
  %101 = vmatprep.subr.bf16.mxu0 0
  %102 = vmatpush1.bf16.msra.mxu0 0
  %103 = vmatprep.subr.bf16.mxu0 0
  %104 = vmatpush1.bf16.msra.mxu0 0
  %105 = vmatprep.subr.bf16.mxu0 0
  %106 = vmatpush1.bf16.msra.mxu0 0
  %107 = vmatprep.subr.bf16.mxu0 0
  %108 = vmatpush1.bf16.msra.mxu0 0
  %109 = vmatprep.subr.bf16.mxu0 0
  %110 = vmatpush1.bf16.msra.mxu0 0
  %111 = vmatprep.subr.bf16.mxu0 0
  %112 = vmatpush1.bf16.msra.mxu0 0
  %113 = vmatprep.subr.bf16.mxu0 0
  %114 = vmatpush1.bf16.msra.mxu0 0
  %115 = vmatprep.subr.bf16.mxu0 0
  %116 = vmatpush1.bf16.msra.mxu0 0
  %117 = vmatprep.subr.bf16.mxu0 0
  %118 = vmatpush1.bf16.msra.mxu0 0
  %119 = vmatprep.subr.bf16.mxu0 0
  %120 = vmatpush1.bf16.msra.mxu0 0
  %121 = vmatprep.mubr.bf16.mxu0 0
  %122 = vmatmul.mubr.bf16.gmra.mrb[0].mxu0 %v87
  %v123 = vpop.f32.mrb[0].mxu0
  %v124 = vadd.f32 0.0, %v123
  %v125 = vpop.f32.mrb[0].mxu0
  %v126 = vpop.f32.mrb[0].mxu0
  %v127 = vpop.f32.mrb[0].mxu0
  %128 = vdwg.mxu0
  %v129 = vpack.c.bf16 %v124, %v124
  %v130 = vld [vmem:[%s1 + $0x8] sm:$0xf]
  %v132 = vsel %vm40, %v130, 0
  %134 = vmatprep.subr.bf16.mxu0 0
  %135 = vmatpush1.bf16.msra.mxu0 %v38
  %136 = vmatprep.subr.bf16.mxu0 0
  %137 = vmatpush1.bf16.msra.mxu0 0
  %138 = vmatprep.subr.bf16.mxu0 0
  %139 = vmatpush1.bf16.msra.mxu0 0
  %140 = vmatprep.subr.bf16.mxu0 0
  %141 = vmatpush1.bf16.msra.mxu0 0
  %142 = vmatprep.subr.bf16.mxu0 0
  %143 = vmatpush1.bf16.msra.mxu0 0
  %144 = vmatprep.subr.bf16.mxu0 0
  %145 = vmatpush1.bf16.msra.mxu0 0
  %146 = vmatprep.subr.bf16.mxu0 0
  %147 = vmatpush1.bf16.msra.mxu0 0
  %148 = vmatprep.subr.bf16.mxu0 0
  %149 = vmatpush1.bf16.msra.mxu0 0
  %150 = vmatprep.subr.bf16.mxu0 0
  %151 = vmatpush1.bf16.msra.mxu0 0
  %152 = vmatprep.subr.bf16.mxu0 0
  %153 = vmatpush1.bf16.msra.mxu0 0
  %154 = vmatprep.subr.bf16.mxu0 0
  %155 = vmatpush1.bf16.msra.mxu0 0
  %156 = vmatprep.subr.bf16.mxu0 0
  %157 = vmatpush1.bf16.msra.mxu0 0
  %158 = vmatprep.subr.bf16.mxu0 0
  %159 = vmatpush1.bf16.msra.mxu0 0
  %160 = vmatprep.subr.bf16.mxu0 0
  %161 = vmatpush1.bf16.msra.mxu0 0
  %162 = vmatprep.subr.bf16.mxu0 0
  %163 = vmatpush1.bf16.msra.mxu0 0
  %164 = vmatprep.subr.bf16.mxu0 0
  %165 = vmatpush1.bf16.msra.mxu0 0
  %166 = vmatprep.mubr.bf16.mxu0 0
  %167 = vmatmul.mubr.bf16.gmra.mrb[0].mxu0 %v132
  %v168 = vpop.f32.mrb[0].mxu0
  %v169 = vadd.f32 0.0, %v168
  %v170 = vpop.f32.mrb[0].mxu0
  %v171 = vpop.f32.mrb[0].mxu0
  %v172 = vpop.f32.mrb[0].mxu0
  %173 = vdwg.mxu0
  %v174 = vpack.c.bf16 %v169, %v169
  %v175 = vld [vmem:[%s2] sm:$0xf]
  %v176 = vld [vmem:[%s2 + $0x4] sm:$0xf]
  %v177 = vld [vmem:[%s2 + $0x8] sm:$0xf]
  %v178 = vld [vmem:[%s2 + $0xc] sm:$0xf]
  %v179 = vld [vmem:[%s2 + $0x10] sm:$0xf]
  %v180 = vld [vmem:[%s2 + $0x14] sm:$0xf]
  %v181 = vld [vmem:[%s2 + $0x18] sm:$0xf]
  %v182 = vld [vmem:[%s2 + $0x1c] sm:$0xf]
  %v183 = vld [vmem:[%s2 + $0x20] sm:$0xf]
  %v184 = vld [vmem:[%s2 + $0x24] sm:$0xf]
  %v185 = vld [vmem:[%s2 + $0x28] sm:$0xf]
  %v186 = vld [vmem:[%s2 + $0x2c] sm:$0xf]
  %v187 = vld [vmem:[%s2 + $0x30] sm:$0xf]
  %v188 = vld [vmem:[%s2 + $0x34] sm:$0xf]
  %v189 = vld [vmem:[%s2 + $0x38] sm:$0xf]
  %v190 = vld [vmem:[%s2 + $0x3c] sm:$0xf]
  %v191 = vld [vmem:[%s2 + $0x40] sm:$0xf]
  %v192 = vld [vmem:[%s2 + $0x44] sm:$0xf]
  %v193 = vld [vmem:[%s2 + $0x48] sm:$0xf]
  %v194 = vld [vmem:[%s2 + $0x4c] sm:$0xf]
  %v195 = vld [vmem:[%s2 + $0x50] sm:$0xf]
  %v196 = vld [vmem:[%s2 + $0x54] sm:$0xf]
  %v197 = vld [vmem:[%s2 + $0x58] sm:$0xf]
  %v198 = vld [vmem:[%s2 + $0x5c] sm:$0xf]
  %v199 = vld [vmem:[%s2 + $0x60] sm:$0xf]
  %v200 = vld [vmem:[%s2 + $0x64] sm:$0xf]
  %v201 = vld [vmem:[%s2 + $0x68] sm:$0xf]
  %v202 = vld [vmem:[%s2 + $0x6c] sm:$0xf]
  %v203 = vld [vmem:[%s2 + $0x70] sm:$0xf]
  %v204 = vld [vmem:[%s2 + $0x74] sm:$0xf]
  %v205 = vld [vmem:[%s2 + $0x78] sm:$0xf]
  %v206 = vld [vmem:[%s2 + $0x7c] sm:$0xf]
  %v207 = vld [vmem:[%s2 + $0x80] sm:$0xf]
  %v208 = vld [vmem:[%s2 + $0x84] sm:$0xf]
  %v209 = vld [vmem:[%s2 + $0x88] sm:$0xf]
  %v210 = vld [vmem:[%s2 + $0x8c] sm:$0xf]
  %v211 = vld [vmem:[%s2 + $0x90] sm:$0xf]
  %v212 = vld [vmem:[%s2 + $0x94] sm:$0xf]
  %v213 = vld [vmem:[%s2 + $0x98] sm:$0xf]
  %v214 = vld [vmem:[%s2 + $0x9c] sm:$0xf]
  %v215 = vld [vmem:[%s2 + $0xa0] sm:$0xf]
  %v216 = vld [vmem:[%s2 + $0xa4] sm:$0xf]
  %v217 = vld [vmem:[%s2 + $0xa8] sm:$0xf]
  %v218 = vld [vmem:[%s2 + $0xac] sm:$0xf]
  %v219 = vld [vmem:[%s2 + $0xb0] sm:$0xf]
  %v220 = vld [vmem:[%s2 + $0xb4] sm:$0xf]
  %v221 = vld [vmem:[%s2 + $0xb8] sm:$0xf]
  %v222 = vld [vmem:[%s2 + $0xbc] sm:$0xf]
  %v223 = vld [vmem:[%s3] sm:$0x1]
  %v225 = vlaneseq
  %v226 = vshrl.u32 %v225, 7
  %v227 = vsub.s32 0, %v226
  %v228 = vrot.slane %v223, %v227
  %v278 = vunpack.c.l.b16 %v175
  %v279 = vunpack.c.l.b16 %v176
  %v280 = vunpack.c.l.b16 %v177
  %v281 = vunpack.c.l.b16 %v178
  %v282 = vunpack.c.l.b16 %v179
  %v283 = vunpack.c.l.b16 %v180
  %v284 = vunpack.c.l.b16 %v181
  %v285 = vunpack.c.l.b16 %v182
  %v286 = vunpack.c.l.b16 %v183
  %v287 = vunpack.c.l.b16 %v184
  %v288 = vunpack.c.l.b16 %v185
  %v289 = vunpack.c.l.b16 %v186
  %v290 = vunpack.c.l.b16 %v187
  %v291 = vunpack.c.l.b16 %v188
  %v292 = vunpack.c.l.b16 %v189
  %v293 = vunpack.c.l.b16 %v190
  %v294 = vunpack.c.l.b16 %v191
  %v295 = vunpack.c.l.b16 %v192
  %v296 = vunpack.c.l.b16 %v193
  %v297 = vunpack.c.l.b16 %v194
  %v298 = vunpack.c.l.b16 %v195
  %v299 = vunpack.c.l.b16 %v196
  %v300 = vunpack.c.l.b16 %v197
  %v301 = vunpack.c.l.b16 %v198
  %v302 = vunpack.c.l.b16 %v199
  %v303 = vunpack.c.l.b16 %v200
  %v304 = vunpack.c.l.b16 %v201
  %v305 = vunpack.c.l.b16 %v202
  %v306 = vunpack.c.l.b16 %v203
  %v307 = vunpack.c.l.b16 %v204
  %v308 = vunpack.c.l.b16 %v205
  %v309 = vunpack.c.l.b16 %v206
  %v310 = vunpack.c.l.b16 %v207
  %v311 = vunpack.c.l.b16 %v208
  %v312 = vunpack.c.l.b16 %v209
  %v313 = vunpack.c.l.b16 %v210
  %v314 = vunpack.c.l.b16 %v211
  %v315 = vunpack.c.l.b16 %v212
  %v316 = vunpack.c.l.b16 %v213
  %v317 = vunpack.c.l.b16 %v214
  %v318 = vunpack.c.l.b16 %v215
  %v319 = vunpack.c.l.b16 %v216
  %v320 = vunpack.c.l.b16 %v217
  %v321 = vunpack.c.l.b16 %v218
  %v322 = vunpack.c.l.b16 %v219
  %v323 = vunpack.c.l.b16 %v220
  %v324 = vunpack.c.l.b16 %v221
  %v325 = vunpack.c.l.b16 %v222
  %v326 = vpack.c.b16 %v279, %v278
  %v327 = vpack.c.b16 %v281, %v280
  %v328 = vpack.c.b16 %v283, %v282
  %v329 = vpack.c.b16 %v285, %v284
  %v330 = vpack.c.b16 %v287, %v286
  %v331 = vpack.c.b16 %v289, %v288
  %v332 = vpack.c.b16 %v291, %v290
  %v333 = vpack.c.b16 %v293, %v292
  %v334 = vpack.c.b16 %v295, %v294
  %v335 = vpack.c.b16 %v297, %v296
  %v336 = vpack.c.b16 %v299, %v298
  %v337 = vpack.c.b16 %v301, %v300
  %v338 = vpack.c.b16 %v303, %v302
  %v339 = vpack.c.b16 %v305, %v304
  %v340 = vpack.c.b16 %v307, %v306
  %v341 = vpack.c.b16 %v309, %v308
  %v342 = vpack.c.b16 %v311, %v310
  %v343 = vpack.c.b16 %v313, %v312
  %v344 = vpack.c.b16 %v315, %v314
  %v345 = vpack.c.b16 %v317, %v316
  %v346 = vpack.c.b16 %v319, %v318
  %v347 = vpack.c.b16 %v321, %v320
  %v348 = vpack.c.b16 %v323, %v322
  %v349 = vpack.c.b16 %v325, %v324
  %374 = vmatprep.subr.bf16.mxu0 0
  %375 = vmatpush1.bf16.msra.mxu0 %v326
  %376 = vmatprep.subr.bf16.mxu0 0
  %377 = vmatpush1.bf16.msra.mxu0 %v327
  %378 = vmatprep.subr.bf16.mxu0 0
  %379 = vmatpush1.bf16.msra.mxu0 %v328
  %380 = vmatprep.subr.bf16.mxu0 0
  %381 = vmatpush1.bf16.msra.mxu0 %v329
  %382 = vmatprep.subr.bf16.mxu0 0
  %383 = vmatpush1.bf16.msra.mxu0 %v330
  %384 = vmatprep.subr.bf16.mxu0 0
  %385 = vmatpush1.bf16.msra.mxu0 %v331
  %386 = vmatprep.subr.bf16.mxu0 0
  %387 = vmatpush1.bf16.msra.mxu0 %v332
  %388 = vmatprep.subr.bf16.mxu0 0
  %389 = vmatpush1.bf16.msra.mxu0 %v333
  %390 = vmatprep.subr.bf16.mxu0 0
  %391 = vmatpush1.bf16.msra.mxu0 %v334
  %392 = vmatprep.subr.bf16.mxu0 0
  %393 = vmatpush1.bf16.msra.mxu0 %v335
  %394 = vmatprep.subr.bf16.mxu0 0
  %395 = vmatpush1.bf16.msra.mxu0 %v336
  %396 = vmatprep.subr.bf16.mxu0 0
  %397 = vmatpush1.bf16.msra.mxu0 %v337
  %398 = vmatprep.subr.bf16.mxu0 0
  %399 = vmatpush1.bf16.msra.mxu0 %v338
  %400 = vmatprep.subr.bf16.mxu0 0
  %401 = vmatpush1.bf16.msra.mxu0 %v339
  %402 = vmatprep.subr.bf16.mxu0 0
  %403 = vmatpush1.bf16.msra.mxu0 %v340
  %404 = vmatprep.subr.bf16.mxu0 0
  %405 = vmatpush1.bf16.msra.mxu0 %v341
  %406 = vmatprep.mubr.bf16.mxu0 %v129
  %407 = vmatmul.mubr.bf16.gmra.mrb[0].mxu0 %v84
  %v408 = vpop.f32.mrb[0].mxu0
  %v409 = vadd.f32 %v228, %v408
  %v410 = vpop.f32.mrb[0].mxu0
  %v411 = vpop.f32.mrb[0].mxu0
  %v412 = vpop.f32.mrb[0].mxu0
  %413 = vdwg.mxu0
  %414 = vmatprep.subr.bf16.mxu0 0
  %415 = vmatpush1.bf16.msra.mxu0 %v342
  %416 = vmatprep.subr.bf16.mxu0 0
  %417 = vmatpush1.bf16.msra.mxu0 %v343
  %418 = vmatprep.subr.bf16.mxu0 0
  %419 = vmatpush1.bf16.msra.mxu0 %v344
  %420 = vmatprep.subr.bf16.mxu0 0
  %421 = vmatpush1.bf16.msra.mxu0 %v345
  %422 = vmatprep.subr.bf16.mxu0 0
  %423 = vmatpush1.bf16.msra.mxu0 %v346
  %424 = vmatprep.subr.bf16.mxu0 0
  %425 = vmatpush1.bf16.msra.mxu0 %v347
  %426 = vmatprep.subr.bf16.mxu0 0
  %427 = vmatpush1.bf16.msra.mxu0 %v348
  %428 = vmatprep.subr.bf16.mxu0 0
  %429 = vmatpush1.bf16.msra.mxu0 %v349
  %430 = vmatprep.subr.bf16.mxu0 0
  %431 = vmatpush1.bf16.msra.mxu0 0
  %432 = vmatprep.subr.bf16.mxu0 0
  %433 = vmatpush1.bf16.msra.mxu0 0
  %434 = vmatprep.subr.bf16.mxu0 0
  %435 = vmatpush1.bf16.msra.mxu0 0
  %436 = vmatprep.subr.bf16.mxu0 0
  %437 = vmatpush1.bf16.msra.mxu0 0
  %438 = vmatprep.subr.bf16.mxu0 0
  %439 = vmatpush1.bf16.msra.mxu0 0
  %440 = vmatprep.subr.bf16.mxu0 0
  %441 = vmatpush1.bf16.msra.mxu0 0
  %442 = vmatprep.subr.bf16.mxu0 0
  %443 = vmatpush1.bf16.msra.mxu0 0
  %444 = vmatprep.subr.bf16.mxu0 0
  %445 = vmatpush1.bf16.msra.mxu0 0
  %446 = vmatprep.mubr.bf16.mxu0 0
  %447 = vmatmul.mubr.bf16.gmra.mrb[0].mxu0 %v174
  %v448 = vpop.f32.mrb[0].mxu0
  %v449 = vadd.f32 %v409, %v448
  %v450 = vpop.f32.mrb[0].mxu0
  %v451 = vpop.f32.mrb[0].mxu0
  %v452 = vpop.f32.mrb[0].mxu0
  %453 = vdwg.mxu0
  %v454 = vmax.f32 %v449, 0.0
  %v455 = vpack.c.bf16 %v454, %v454
  %v456 = vld [vmem:[%s4] sm:$0xf]
  %vm457 = vcmask 64512
  %v459 = vsel %vm457, %v456, 0
  %vm461 = vcmask 1043456
  %v463 = vsel %vm461, %v455, 0
  %465 = vmatprep.subr.bf16.mxu0 0
  %466 = vmatpush1.bf16.msra.mxu0 %v463
  %467 = vmatprep.subr.bf16.mxu0 0
  %468 = vmatpush1.bf16.msra.mxu0 0
  %469 = vmatprep.subr.bf16.mxu0 0
  %470 = vmatpush1.bf16.msra.mxu0 0
  %471 = vmatprep.subr.bf16.mxu0 0
  %472 = vmatpush1.bf16.msra.mxu0 0
  %473 = vmatprep.subr.bf16.mxu0 0
  %474 = vmatpush1.bf16.msra.mxu0 0
  %475 = vmatprep.subr.bf16.mxu0 0
  %476 = vmatpush1.bf16.msra.mxu0 0
  %477 = vmatprep.subr.bf16.mxu0 0
  %478 = vmatpush1.bf16.msra.mxu0 0
  %479 = vmatprep.subr.bf16.mxu0 0
  %480 = vmatpush1.bf16.msra.mxu0 0
  %481 = vmatprep.subr.bf16.mxu0 0
  %482 = vmatpush1.bf16.msra.mxu0 0
  %483 = vmatprep.subr.bf16.mxu0 0
  %484 = vmatpush1.bf16.msra.mxu0 0
  %485 = vmatprep.subr.bf16.mxu0 0
  %486 = vmatpush1.bf16.msra.mxu0 0
  %487 = vmatprep.subr.bf16.mxu0 0
  %488 = vmatpush1.bf16.msra.mxu0 0
  %489 = vmatprep.subr.bf16.mxu0 0
  %490 = vmatpush1.bf16.msra.mxu0 0
  %491 = vmatprep.subr.bf16.mxu0 0
  %492 = vmatpush1.bf16.msra.mxu0 0
  %493 = vmatprep.subr.bf16.mxu0 0
  %494 = vmatpush1.bf16.msra.mxu0 0
  %495 = vmatprep.subr.bf16.mxu0 0
  %496 = vmatpush1.bf16.msra.mxu0 0
  %497 = vmatprep.mubr.bf16.mxu0 0
  %498 = vmatmul.mubr.bf16.gmra.mrb[0].mxu0 %v459
  %v499 = vpop.f32.mrb[0].mxu0
  %v500 = vadd.f32 0.0, %v499
  %v501 = vpop.f32.mrb[0].mxu0
  %v502 = vpop.f32.mrb[0].mxu0
  %v503 = vpop.f32.mrb[0].mxu0
  %504 = vdwg.mxu0
  %v505 = vpack.c.bf16 %v500, %v500
  %v506 = vld [vmem:[%s4 + $0x4] sm:$0xf]
  %v508 = vsel %vm457, %v506, 0
  %510 = vmatprep.subr.bf16.mxu0 0
  %511 = vmatpush1.bf16.msra.mxu0 %v463
  %512 = vmatprep.subr.bf16.mxu0 0
  %513 = vmatpush1.bf16.msra.mxu0 0
  %514 = vmatprep.subr.bf16.mxu0 0
  %515 = vmatpush1.bf16.msra.mxu0 0
  %516 = vmatprep.subr.bf16.mxu0 0
  %517 = vmatpush1.bf16.msra.mxu0 0
  %518 = vmatprep.subr.bf16.mxu0 0
  %519 = vmatpush1.bf16.msra.mxu0 0
  %520 = vmatprep.subr.bf16.mxu0 0
  %521 = vmatpush1.bf16.msra.mxu0 0
  %522 = vmatprep.subr.bf16.mxu0 0
  %523 = vmatpush1.bf16.msra.mxu0 0
  %524 = vmatprep.subr.bf16.mxu0 0
  %525 = vmatpush1.bf16.msra.mxu0 0
  %526 = vmatprep.subr.bf16.mxu0 0
  %527 = vmatpush1.bf16.msra.mxu0 0
  %528 = vmatprep.subr.bf16.mxu0 0
  %529 = vmatpush1.bf16.msra.mxu0 0
  %530 = vmatprep.subr.bf16.mxu0 0
  %531 = vmatpush1.bf16.msra.mxu0 0
  %532 = vmatprep.subr.bf16.mxu0 0
  %533 = vmatpush1.bf16.msra.mxu0 0
  %534 = vmatprep.subr.bf16.mxu0 0
  %535 = vmatpush1.bf16.msra.mxu0 0
  %536 = vmatprep.subr.bf16.mxu0 0
  %537 = vmatpush1.bf16.msra.mxu0 0
  %538 = vmatprep.subr.bf16.mxu0 0
  %539 = vmatpush1.bf16.msra.mxu0 0
  %540 = vmatprep.subr.bf16.mxu0 0
  %541 = vmatpush1.bf16.msra.mxu0 0
  %542 = vmatprep.mubr.bf16.mxu0 0
  %543 = vmatmul.mubr.bf16.gmra.mrb[0].mxu0 %v508
  %v544 = vpop.f32.mrb[0].mxu0
  %v545 = vadd.f32 0.0, %v544
  %v546 = vpop.f32.mrb[0].mxu0
  %v547 = vpop.f32.mrb[0].mxu0
  %v548 = vpop.f32.mrb[0].mxu0
  %549 = vdwg.mxu0
  %v550 = vpack.c.bf16 %v545, %v545
  %v551 = vld [vmem:[%s4 + $0x8] sm:$0xf]
  %v553 = vsel %vm457, %v551, 0
  %555 = vmatprep.subr.bf16.mxu0 0
  %556 = vmatpush1.bf16.msra.mxu0 %v463
  %557 = vmatprep.subr.bf16.mxu0 0
  %558 = vmatpush1.bf16.msra.mxu0 0
  %559 = vmatprep.subr.bf16.mxu0 0
  %560 = vmatpush1.bf16.msra.mxu0 0
  %561 = vmatprep.subr.bf16.mxu0 0
  %562 = vmatpush1.bf16.msra.mxu0 0
  %563 = vmatprep.subr.bf16.mxu0 0
  %564 = vmatpush1.bf16.msra.mxu0 0
  %565 = vmatprep.subr.bf16.mxu0 0
  %566 = vmatpush1.bf16.msra.mxu0 0
  %567 = vmatprep.subr.bf16.mxu0 0
  %568 = vmatpush1.bf16.msra.mxu0 0
  %569 = vmatprep.subr.bf16.mxu0 0
  %570 = vmatpush1.bf16.msra.mxu0 0
  %571 = vmatprep.subr.bf16.mxu0 0
  %572 = vmatpush1.bf16.msra.mxu0 0
  %573 = vmatprep.subr.bf16.mxu0 0
  %574 = vmatpush1.bf16.msra.mxu0 0
  %575 = vmatprep.subr.bf16.mxu0 0
  %576 = vmatpush1.bf16.msra.mxu0 0
  %577 = vmatprep.subr.bf16.mxu0 0
  %578 = vmatpush1.bf16.msra.mxu0 0
  %579 = vmatprep.subr.bf16.mxu0 0
  %580 = vmatpush1.bf16.msra.mxu0 0
  %581 = vmatprep.subr.bf16.mxu0 0
  %582 = vmatpush1.bf16.msra.mxu0 0
  %583 = vmatprep.subr.bf16.mxu0 0
  %584 = vmatpush1.bf16.msra.mxu0 0
  %585 = vmatprep.subr.bf16.mxu0 0
  %586 = vmatpush1.bf16.msra.mxu0 0
  %587 = vmatprep.mubr.bf16.mxu0 0
  %588 = vmatmul.mubr.bf16.gmra.mrb[0].mxu0 %v553
  %v589 = vpop.f32.mrb[0].mxu0
  %v590 = vadd.f32 0.0, %v589
  %v591 = vpop.f32.mrb[0].mxu0
  %v592 = vpop.f32.mrb[0].mxu0
  %v593 = vpop.f32.mrb[0].mxu0
  %594 = vdwg.mxu0
  %v595 = vpack.c.bf16 %v590, %v590
  %v596 = vld [vmem:[%s5] sm:$0xf]
  %v597 = vld [vmem:[%s5 + $0x4] sm:$0xf]
  %v598 = vld [vmem:[%s5 + $0x8] sm:$0xf]
  %v599 = vld [vmem:[%s5 + $0xc] sm:$0xf]
  %v600 = vld [vmem:[%s5 + $0x10] sm:$0xf]
  %v601 = vld [vmem:[%s5 + $0x14] sm:$0xf]
  %v602 = vld [vmem:[%s5 + $0x18] sm:$0xf]
  %v603 = vld [vmem:[%s5 + $0x1c] sm:$0xf]
  %v604 = vld [vmem:[%s5 + $0x20] sm:$0xf]
  %v605 = vld [vmem:[%s5 + $0x24] sm:$0xf]
  %v606 = vld [vmem:[%s5 + $0x28] sm:$0xf]
  %v607 = vld [vmem:[%s5 + $0x2c] sm:$0xf]
  %v608 = vld [vmem:[%s5 + $0x30] sm:$0xf]
  %v609 = vld [vmem:[%s5 + $0x34] sm:$0xf]
  %v610 = vld [vmem:[%s5 + $0x38] sm:$0xf]
  %v611 = vld [vmem:[%s5 + $0x3c] sm:$0xf]
  %v612 = vld [vmem:[%s5 + $0x40] sm:$0xf]
  %v613 = vld [vmem:[%s5 + $0x44] sm:$0xf]
  %v614 = vld [vmem:[%s5 + $0x48] sm:$0xf]
  %v615 = vld [vmem:[%s5 + $0x4c] sm:$0xf]
  %v616 = vld [vmem:[%s5 + $0x50] sm:$0xf]
  %v617 = vld [vmem:[%s5 + $0x54] sm:$0xf]
  %v618 = vld [vmem:[%s5 + $0x58] sm:$0xf]
  %v619 = vld [vmem:[%s5 + $0x5c] sm:$0xf]
  %v620 = vld [vmem:[%s5 + $0x60] sm:$0xf]
  %v621 = vld [vmem:[%s5 + $0x64] sm:$0xf]
  %v622 = vld [vmem:[%s5 + $0x68] sm:$0xf]
  %v623 = vld [vmem:[%s5 + $0x6c] sm:$0xf]
  %v624 = vld [vmem:[%s5 + $0x70] sm:$0xf]
  %v625 = vld [vmem:[%s5 + $0x74] sm:$0xf]
  %v626 = vld [vmem:[%s5 + $0x78] sm:$0xf]
  %v627 = vld [vmem:[%s5 + $0x7c] sm:$0xf]
  %v628 = vld [vmem:[%s5 + $0x80] sm:$0xf]
  %v629 = vld [vmem:[%s5 + $0x84] sm:$0xf]
  %v630 = vld [vmem:[%s5 + $0x88] sm:$0xf]
  %v631 = vld [vmem:[%s5 + $0x8c] sm:$0xf]
  %v632 = vld [vmem:[%s5 + $0x90] sm:$0xf]
  %v633 = vld [vmem:[%s5 + $0x94] sm:$0xf]
  %v634 = vld [vmem:[%s5 + $0x98] sm:$0xf]
  %v635 = vld [vmem:[%s5 + $0x9c] sm:$0xf]
  %v636 = vld [vmem:[%s5 + $0xa0] sm:$0xf]
  %v637 = vld [vmem:[%s5 + $0xa4] sm:$0xf]
  %v638 = vld [vmem:[%s5 + $0xa8] sm:$0xf]
  %v639 = vld [vmem:[%s5 + $0xac] sm:$0xf]
  %v640 = vld [vmem:[%s5 + $0xb0] sm:$0xf]
  %v641 = vld [vmem:[%s5 + $0xb4] sm:$0xf]
  %v642 = vld [vmem:[%s5 + $0xb8] sm:$0xf]
  %v643 = vld [vmem:[%s5 + $0xbc] sm:$0xf]
  %v644 = vld [vmem:[%s6] sm:$0x1]
  %v646 = vlaneseq
  %v647 = vshrl.u32 %v646, 7
  %v648 = vsub.s32 0, %v647
  %v649 = vrot.slane %v644, %v648
  %v699 = vunpack.c.l.b16 %v596
  %v700 = vunpack.c.l.b16 %v597
  %v701 = vunpack.c.l.b16 %v598
  %v702 = vunpack.c.l.b16 %v599
  %v703 = vunpack.c.l.b16 %v600
  %v704 = vunpack.c.l.b16 %v601
  %v705 = vunpack.c.l.b16 %v602
  %v706 = vunpack.c.l.b16 %v603
  %v707 = vunpack.c.l.b16 %v604
  %v708 = vunpack.c.l.b16 %v605
  %v709 = vunpack.c.l.b16 %v606
  %v710 = vunpack.c.l.b16 %v607
  %v711 = vunpack.c.l.b16 %v608
  %v712 = vunpack.c.l.b16 %v609
  %v713 = vunpack.c.l.b16 %v610
  %v714 = vunpack.c.l.b16 %v611
  %v715 = vunpack.c.l.b16 %v612
  %v716 = vunpack.c.l.b16 %v613
  %v717 = vunpack.c.l.b16 %v614
  %v718 = vunpack.c.l.b16 %v615
  %v719 = vunpack.c.l.b16 %v616
  %v720 = vunpack.c.l.b16 %v617
  %v721 = vunpack.c.l.b16 %v618
  %v722 = vunpack.c.l.b16 %v619
  %v723 = vunpack.c.l.b16 %v620
  %v724 = vunpack.c.l.b16 %v621
  %v725 = vunpack.c.l.b16 %v622
  %v726 = vunpack.c.l.b16 %v623
  %v727 = vunpack.c.l.b16 %v624
  %v728 = vunpack.c.l.b16 %v625
  %v729 = vunpack.c.l.b16 %v626
  %v730 = vunpack.c.l.b16 %v627
  %v731 = vunpack.c.l.b16 %v628
  %v732 = vunpack.c.l.b16 %v629
  %v733 = vunpack.c.l.b16 %v630
  %v734 = vunpack.c.l.b16 %v631
  %v735 = vunpack.c.l.b16 %v632
  %v736 = vunpack.c.l.b16 %v633
  %v737 = vunpack.c.l.b16 %v634
  %v738 = vunpack.c.l.b16 %v635
  %v739 = vunpack.c.l.b16 %v636
  %v740 = vunpack.c.l.b16 %v637
  %v741 = vunpack.c.l.b16 %v638
  %v742 = vunpack.c.l.b16 %v639
  %v743 = vunpack.c.l.b16 %v640
  %v744 = vunpack.c.l.b16 %v641
  %v745 = vunpack.c.l.b16 %v642
  %v746 = vunpack.c.l.b16 %v643
  %v747 = vpack.c.b16 %v700, %v699
  %v748 = vpack.c.b16 %v702, %v701
  %v749 = vpack.c.b16 %v704, %v703
  %v750 = vpack.c.b16 %v706, %v705
  %v751 = vpack.c.b16 %v708, %v707
  %v752 = vpack.c.b16 %v710, %v709
  %v753 = vpack.c.b16 %v712, %v711
  %v754 = vpack.c.b16 %v714, %v713
  %v755 = vpack.c.b16 %v716, %v715
  %v756 = vpack.c.b16 %v718, %v717
  %v757 = vpack.c.b16 %v720, %v719
  %v758 = vpack.c.b16 %v722, %v721
  %v759 = vpack.c.b16 %v724, %v723
  %v760 = vpack.c.b16 %v726, %v725
  %v761 = vpack.c.b16 %v728, %v727
  %v762 = vpack.c.b16 %v730, %v729
  %v763 = vpack.c.b16 %v732, %v731
  %v764 = vpack.c.b16 %v734, %v733
  %v765 = vpack.c.b16 %v736, %v735
  %v766 = vpack.c.b16 %v738, %v737
  %v767 = vpack.c.b16 %v740, %v739
  %v768 = vpack.c.b16 %v742, %v741
  %v769 = vpack.c.b16 %v744, %v743
  %v770 = vpack.c.b16 %v746, %v745
  %795 = vmatprep.subr.bf16.mxu0 0
  %796 = vmatpush1.bf16.msra.mxu0 %v747
  %797 = vmatprep.subr.bf16.mxu0 0
  %798 = vmatpush1.bf16.msra.mxu0 %v748
  %799 = vmatprep.subr.bf16.mxu0 0
  %800 = vmatpush1.bf16.msra.mxu0 %v749
  %801 = vmatprep.subr.bf16.mxu0 0
  %802 = vmatpush1.bf16.msra.mxu0 %v750
  %803 = vmatprep.subr.bf16.mxu0 0
  %804 = vmatpush1.bf16.msra.mxu0 %v751
  %805 = vmatprep.subr.bf16.mxu0 0
  %806 = vmatpush1.bf16.msra.mxu0 %v752
  %807 = vmatprep.subr.bf16.mxu0 0
  %808 = vmatpush1.bf16.msra.mxu0 %v753
  %809 = vmatprep.subr.bf16.mxu0 0
  %810 = vmatpush1.bf16.msra.mxu0 %v754
  %811 = vmatprep.subr.bf16.mxu0 0
  %812 = vmatpush1.bf16.msra.mxu0 %v755
  %813 = vmatprep.subr.bf16.mxu0 0
  %814 = vmatpush1.bf16.msra.mxu0 %v756
  %815 = vmatprep.subr.bf16.mxu0 0
  %816 = vmatpush1.bf16.msra.mxu0 %v757
  %817 = vmatprep.subr.bf16.mxu0 0
  %818 = vmatpush1.bf16.msra.mxu0 %v758
  %819 = vmatprep.subr.bf16.mxu0 0
  %820 = vmatpush1.bf16.msra.mxu0 %v759
  %821 = vmatprep.subr.bf16.mxu0 0
  %822 = vmatpush1.bf16.msra.mxu0 %v760
  %823 = vmatprep.subr.bf16.mxu0 0
  %824 = vmatpush1.bf16.msra.mxu0 %v761
  %825 = vmatprep.subr.bf16.mxu0 0
  %826 = vmatpush1.bf16.msra.mxu0 %v762
  %827 = vmatprep.mubr.bf16.mxu0 %v550
  %828 = vmatmul.mubr.bf16.gmra.mrb[0].mxu0 %v505
  %v829 = vpop.f32.mrb[0].mxu0
  %v830 = vadd.f32 %v649, %v829
  %v831 = vpop.f32.mrb[0].mxu0
  %v832 = vpop.f32.mrb[0].mxu0
  %v833 = vpop.f32.mrb[0].mxu0
  %834 = vdwg.mxu0
  %835 = vmatprep.subr.bf16.mxu0 0
  %836 = vmatpush1.bf16.msra.mxu0 %v763
  %837 = vmatprep.subr.bf16.mxu0 0
  %838 = vmatpush1.bf16.msra.mxu0 %v764
  %839 = vmatprep.subr.bf16.mxu0 0
  %840 = vmatpush1.bf16.msra.mxu0 %v765
  %841 = vmatprep.subr.bf16.mxu0 0
  %842 = vmatpush1.bf16.msra.mxu0 %v766
  %843 = vmatprep.subr.bf16.mxu0 0
  %844 = vmatpush1.bf16.msra.mxu0 %v767
  %845 = vmatprep.subr.bf16.mxu0 0
  %846 = vmatpush1.bf16.msra.mxu0 %v768
  %847 = vmatprep.subr.bf16.mxu0 0
  %848 = vmatpush1.bf16.msra.mxu0 %v769
  %849 = vmatprep.subr.bf16.mxu0 0
  %850 = vmatpush1.bf16.msra.mxu0 %v770
  %851 = vmatprep.subr.bf16.mxu0 0
  %852 = vmatpush1.bf16.msra.mxu0 0
  %853 = vmatprep.subr.bf16.mxu0 0
  %854 = vmatpush1.bf16.msra.mxu0 0
  %855 = vmatprep.subr.bf16.mxu0 0
  %856 = vmatpush1.bf16.msra.mxu0 0
  %857 = vmatprep.subr.bf16.mxu0 0
  %858 = vmatpush1.bf16.msra.mxu0 0
  %859 = vmatprep.subr.bf16.mxu0 0
  %860 = vmatpush1.bf16.msra.mxu0 0
  %861 = vmatprep.subr.bf16.mxu0 0
  %862 = vmatpush1.bf16.msra.mxu0 0
  %863 = vmatprep.subr.bf16.mxu0 0
  %864 = vmatpush1.bf16.msra.mxu0 0
  %865 = vmatprep.subr.bf16.mxu0 0
  %866 = vmatpush1.bf16.msra.mxu0 0
  %867 = vmatprep.mubr.bf16.mxu0 0
  %868 = vmatmul.mubr.bf16.gmra.mrb[0].mxu0 %v595
  %v869 = vpop.f32.mrb[0].mxu0
  %v870 = vadd.f32 %v830, %v869
  %v871 = vpop.f32.mrb[0].mxu0
  %v872 = vpop.f32.mrb[0].mxu0
  %v873 = vpop.f32.mrb[0].mxu0
  %874 = vdwg.mxu0
  %v875 = vld [vmem:[%s7] sm:$0xf]
  %v877 = vsel %vm40, %v875, 0
  %879 = vmatprep.subr.bf16.mxu0 0
  %880 = vmatpush1.bf16.msra.mxu0 %v38
  %881 = vmatprep.subr.bf16.mxu0 0
  %882 = vmatpush1.bf16.msra.mxu0 0
  %883 = vmatprep.subr.bf16.mxu0 0
  %884 = vmatpush1.bf16.msra.mxu0 0
  %885 = vmatprep.subr.bf16.mxu0 0
  %886 = vmatpush1.bf16.msra.mxu0 0
  %887 = vmatprep.subr.bf16.mxu0 0
  %888 = vmatpush1.bf16.msra.mxu0 0
  %889 = vmatprep.subr.bf16.mxu0 0
  %890 = vmatpush1.bf16.msra.mxu0 0
  %891 = vmatprep.subr.bf16.mxu0 0
  %892 = vmatpush1.bf16.msra.mxu0 0
  %893 = vmatprep.subr.bf16.mxu0 0
  %894 = vmatpush1.bf16.msra.mxu0 0
  %895 = vmatprep.subr.bf16.mxu0 0
  %896 = vmatpush1.bf16.msra.mxu0 0
  %897 = vmatprep.subr.bf16.mxu0 0
  %898 = vmatpush1.bf16.msra.mxu0 0
  %899 = vmatprep.subr.bf16.mxu0 0
  %900 = vmatpush1.bf16.msra.mxu0 0
  %901 = vmatprep.subr.bf16.mxu0 0
  %902 = vmatpush1.bf16.msra.mxu0 0
  %903 = vmatprep.subr.bf16.mxu0 0
  %904 = vmatpush1.bf16.msra.mxu0 0
  %905 = vmatprep.subr.bf16.mxu0 0
  %906 = vmatpush1.bf16.msra.mxu0 0
  %907 = vmatprep.subr.bf16.mxu0 0
  %908 = vmatpush1.bf16.msra.mxu0 0
  %909 = vmatprep.subr.bf16.mxu0 0
  %910 = vmatpush1.bf16.msra.mxu0 0
  %911 = vmatprep.mubr.bf16.mxu0 0
  %912 = vmatmul.mubr.bf16.gmra.mrb[0].mxu0 %v877
  %v913 = vpop.f32.mrb[0].mxu0
  %v914 = vadd.f32 0.0, %v913
  %v915 = vpop.f32.mrb[0].mxu0
  %v916 = vpop.f32.mrb[0].mxu0
  %v917 = vpop.f32.mrb[0].mxu0
  %918 = vdwg.mxu0
  %v919 = vpack.c.bf16 %v914, %v914
  %v920 = vld [vmem:[%s8] sm:$0xf]
  %v921 = vld [vmem:[%s8 + $0x4] sm:$0xf]
  %v922 = vld [vmem:[%s8 + $0x8] sm:$0xf]
  %v923 = vld [vmem:[%s8 + $0xc] sm:$0xf]
  %v924 = vld [vmem:[%s8 + $0x10] sm:$0xf]
  %v925 = vld [vmem:[%s8 + $0x14] sm:$0xf]
  %v926 = vld [vmem:[%s8 + $0x18] sm:$0xf]
  %v927 = vld [vmem:[%s8 + $0x1c] sm:$0xf]
  %v928 = vld [vmem:[%s8 + $0x20] sm:$0xf]
  %v929 = vld [vmem:[%s8 + $0x24] sm:$0xf]
  %v930 = vld [vmem:[%s8 + $0x28] sm:$0xf]
  %v931 = vld [vmem:[%s8 + $0x2c] sm:$0xf]
  %v932 = vld [vmem:[%s8 + $0x30] sm:$0xf]
  %v933 = vld [vmem:[%s8 + $0x34] sm:$0xf]
  %v934 = vld [vmem:[%s8 + $0x38] sm:$0xf]
  %v935 = vld [vmem:[%s8 + $0x3c] sm:$0xf]
  %v936 = vld [vmem:[%s9] sm:$0x1]
  %v938 = vlaneseq
  %v939 = vshrl.u32 %v938, 7
  %v940 = vsub.s32 0, %v939
  %v941 = vrot.slane %v936, %v940
  %v959 = vunpack.c.l.b16 %v920
  %v960 = vunpack.c.l.b16 %v921
  %v961 = vunpack.c.l.b16 %v922
  %v962 = vunpack.c.l.b16 %v923
  %v963 = vunpack.c.l.b16 %v924
  %v964 = vunpack.c.l.b16 %v925
  %v965 = vunpack.c.l.b16 %v926
  %v966 = vunpack.c.l.b16 %v927
  %v967 = vunpack.c.l.b16 %v928
  %v968 = vunpack.c.l.b16 %v929
  %v969 = vunpack.c.l.b16 %v930
  %v970 = vunpack.c.l.b16 %v931
  %v971 = vunpack.c.l.b16 %v932
  %v972 = vunpack.c.l.b16 %v933
  %v973 = vunpack.c.l.b16 %v934
  %v974 = vunpack.c.l.b16 %v935
  %v975 = vpack.c.b16 %v960, %v959
  %v976 = vpack.c.b16 %v962, %v961
  %v977 = vpack.c.b16 %v964, %v963
  %v978 = vpack.c.b16 %v966, %v965
  %v979 = vpack.c.b16 %v968, %v967
  %v980 = vpack.c.b16 %v970, %v969
  %v981 = vpack.c.b16 %v972, %v971
  %v982 = vpack.c.b16 %v974, %v973
  %991 = vmatprep.subr.bf16.mxu0 0
  %992 = vmatpush1.bf16.msra.mxu0 %v975
  %993 = vmatprep.subr.bf16.mxu0 0
  %994 = vmatpush1.bf16.msra.mxu0 %v976
  %995 = vmatprep.subr.bf16.mxu0 0
  %996 = vmatpush1.bf16.msra.mxu0 %v977
  %997 = vmatprep.subr.bf16.mxu0 0
  %998 = vmatpush1.bf16.msra.mxu0 %v978
  %999 = vmatprep.subr.bf16.mxu0 0
  %1000 = vmatpush1.bf16.msra.mxu0 %v979
  %1001 = vmatprep.subr.bf16.mxu0 0
  %1002 = vmatpush1.bf16.msra.mxu0 %v980
  %1003 = vmatprep.subr.bf16.mxu0 0
  %1004 = vmatpush1.bf16.msra.mxu0 %v981
  %1005 = vmatprep.subr.bf16.mxu0 0
  %1006 = vmatpush1.bf16.msra.mxu0 %v982
  %1007 = vmatprep.subr.bf16.mxu0 0
  %1008 = vmatpush1.bf16.msra.mxu0 0
  %1009 = vmatprep.subr.bf16.mxu0 0
  %1010 = vmatpush1.bf16.msra.mxu0 0
  %1011 = vmatprep.subr.bf16.mxu0 0
  %1012 = vmatpush1.bf16.msra.mxu0 0
  %1013 = vmatprep.subr.bf16.mxu0 0
  %1014 = vmatpush1.bf16.msra.mxu0 0
  %1015 = vmatprep.subr.bf16.mxu0 0
  %1016 = vmatpush1.bf16.msra.mxu0 0
  %1017 = vmatprep.subr.bf16.mxu0 0
  %1018 = vmatpush1.bf16.msra.mxu0 0
  %1019 = vmatprep.subr.bf16.mxu0 0
  %1020 = vmatpush1.bf16.msra.mxu0 0
  %1021 = vmatprep.subr.bf16.mxu0 0
  %1022 = vmatpush1.bf16.msra.mxu0 0
  %1023 = vmatprep.mubr.bf16.mxu0 0
  %1024 = vmatmul.mubr.bf16.gmra.mrb[0].mxu0 %v919
  %v1025 = vpop.f32.mrb[0].mxu0
  %v1026 = vadd.f32 %v941, %v1025
  %v1027 = vpop.f32.mrb[0].mxu0
  %v1028 = vpop.f32.mrb[0].mxu0
  %v1029 = vpop.f32.mrb[0].mxu0
  %1030 = vdwg.mxu0
  %v1031 = vadd.f32 %v870, %v1026
  %v1032 = vmax.f32 %v1031, 0.0
  %1033 = vst [vmem:[%s10] sm:$0xff] %v1032
  // Predicated region
  $region42: #{basic_block_forward.1} parent=0 // pred_check
    _
  $region43: #{basic_block_forward.1} parent=0 // pred_check_branch
    %1035 = sbr.rel (0) target = $region45
  $region44: #{basic_block_forward.1} parent=0 // pred_region
    _
  $region45: #{basic_block_forward.1} parent=0 // pred_fallthru
    _
  // Predicated region
  $region46: #{basic_block_forward.1} parent=0 // pred_check
    _
  $region47: #{basic_block_forward.1} parent=0 // pred_check_branch
    %1037 = sbr.rel (0) target = $region49
  $region48: #{basic_block_forward.1} parent=0 // pred_region
    _
  $region49: #{basic_block_forward.1} parent=0 // pred_fallthru
    _

</llo_original>
